<compile_context>
chip_gen: v5e
topology: v5e:2x2
jax: 0.10.0
libtpu: 0.0.40
codegen_flags: <defaults>
</compile_context>

<pallas_src>
import jax
import jax.numpy as jnp
from jax.experimental import pallas as pl
from jax.experimental.pallas import tpu as pltpu

LN_EPS = 1e-5  # nn.LayerNorm default


def _round_up(a: int, m: int) -> int:
    return ((a + m - 1) // m) * m


# One-time probe: does this JAX version accept pipeline_mode=pl.Buffered(1)?
try:
    pl.BlockSpec((8, 128), lambda i: (0, 0), pipeline_mode=pl.Buffered(1))
    _HAS_BUFFERED = True
except (TypeError, AttributeError):
    _HAS_BUFFERED = False


def _vmem_capacity_bytes() -> int:
    """Generation-aware VMEM capacity: v7x TCs have 64 MiB, v5e/v6e 128 MiB."""
    try:
        return int(pltpu.get_tpu_info().vmem_capacity_bytes)
    except Exception:  # hardware probe unavailable -> fall back to device_kind parse
        kind = jax.devices()[0].device_kind.lower() if jax.devices() else ""
        if "v7" in kind or "7x" in kind:
            return 64 * 1024 * 1024
        return 128 * 1024 * 1024


def _make_kernel(d1: int, d1p: int, compute_dtype):
    """Kernel factory closing over the true/padded LayerNorm width."""
    inv_d1 = 1.0 / float(d1)
    needs_mask = d1p != d1

    def kernel(x_ref, w1_ref, lnp_ref, w2_ref, b2_ref, o_ref):
        # --- Linear(input_dim -> 3*hidden): cast x to the MXU dtype in-kernel
        #     (saves a wrapper-side HBM round trip); f32 accumulation on the MXU.
        x = x_ref[...].astype(compute_dtype)
        h1 = jnp.dot(x, w1_ref[...], preferred_element_type=jnp.float32)

        lnp = lnp_ref[...]                       # (3, d1p): [b1; gamma; beta], zero-padded
        h1 = h1 + lnp[0:1, :]                    # bias b1

        # --- LayerNorm over the true d1 lanes. Padded lanes of h1 are exactly 0
        #     (zero-padded W1 columns and b1), so the mean needs no mask; the
        #     variance masks them out and divides by the true d1.
        mean = jnp.sum(h1, axis=-1, keepdims=True) * inv_d1
        centered = h1 - mean
        if needs_mask:
            lane = jax.lax.broadcasted_iota(jnp.int32, centered.shape, 1)
            centered = jnp.where(lane < d1, centered, 0.0)
        var = jnp.sum(centered * centered, axis=-1, keepdims=True) * inv_d1
        h1 = centered * jax.lax.rsqrt(var + LN_EPS)
        h1 = h1 * lnp[1:2, :] + lnp[2:3, :]      # gamma, beta (padded lanes stay 0)

        # --- Dropout(0.05): identity in eval/inference mode.
        # TODO(synk): training-mode dropout would use pltpu.prng_seed / prng_random_bits.

        # --- ReLU ---
        h1 = jnp.maximum(h1, 0.0)

        # --- Linear(3*hidden -> 2*hidden), lane-dense padded output width.
        #     (W2 padded rows are zero, so padded h1 lanes cannot corrupt the result.)
        h2 = jnp.dot(h1.astype(compute_dtype), w2_ref[...],
                     preferred_element_type=jnp.float32)
        h2 = h2 + b2_ref[...]
        o_ref[...] = h2.astype(o_ref.dtype)

    return kernel


def prepare_params(params, *, compute_dtype=jnp.bfloat16):
    """One-time weight preparation (call once, reuse every forward):
       * zero-pad 3*hidden and 2*hidden feature dims to 128-lane multiples,
       * cast W1/W2 to the MXU compute dtype,
       * stack b1/gamma/beta into a single (3, d1p) f32 operand."""
    w1, b1, gamma, beta, w2, b2 = params
    input_dim, d1 = w1.shape
    d2 = w2.shape[1]
    d1p = _round_up(d1, 128)
    d2p = _round_up(d2, 128)

    w1c = jnp.pad(w1, ((0, 0), (0, d1p - d1))).astype(compute_dtype)
    lnp = jnp.pad(jnp.concatenate([b1, gamma, beta], axis=0),
                  ((0, 0), (0, d1p - d1))).astype(jnp.float32)
    w2c = jnp.pad(w2, ((0, d1p - d1), (0, d2p - d2))).astype(compute_dtype)
    b2p = jnp.pad(b2, ((0, 0), (0, d2p - d2))).astype(jnp.float32)

    dims = dict(input_dim=input_dim, d1=d1, d1p=d1p, d2=d2, d2p=d2p,
                compute_dtype=compute_dtype)
    return (w1c, lnp, w2c, b2p, dims)


def fusion_layer(x, prepared, *, tile_rows=None, out_dtype=jnp.float32):
    """x: (..., input_dim) float32. Returns (..., 2*hidden) in out_dtype."""
    w1c, lnp, w2c, b2p, dims = prepared
    input_dim, d1, d1p = dims["input_dim"], dims["d1"], dims["d1p"]
    d2, d2p = dims["d2"], dims["d2p"]
    compute_dtype = dims["compute_dtype"]
    assert x.shape[-1] == input_dim
    lead = x.shape[:-1]

    x2 = x.reshape(-1, input_dim)            # stays f32; cast to bf16 inside the kernel
    n = x2.shape[0]

    out_itemsize = jnp.dtype(out_dtype).itemsize
    row_align = max(8, 32 // out_itemsize)   # 8 for f32 output, 16 for bf16

    vmem_cap = _vmem_capacity_bytes()
    small_vmem = vmem_cap <= 64 * 1024 * 1024            # v7x
    if tile_rows is None:
        tile_rows = 256 if small_vmem else 512
    vmem_limit = (40 if small_vmem else 48) * 1024 * 1024
    budget = vmem_limit - 8 * 1024 * 1024                 # headroom for Mosaic scratch

    kernel = _make_kernel(d1, d1p, compute_dtype)

    def footprint(tile, weight_bufs):
        wts = weight_bufs * ((input_dim * d1p + d1p * d2p) * 2      # bf16 W1, W2
                             + 8 * d1p * 4 + 8 * d2p * 4)           # lnp, b2 (sublane-padded)
        io = 2 * tile * input_dim * 4 + 2 * tile * d2p * out_itemsize  # double-buffered x / out
        inter = tile * (input_dim * 2 + d1p * 6 + d2p * 4)           # x bf16, h1 f32+bf16, h2 f32
        return wts + io + inter

    def run(single_buffer):
        weight_bufs = 1 if single_buffer else 2
        # Balanced row tiles: >=2 grid steps (megacore) when n allows; padding waste
        # < one row-align unit per tile; shrink until the VMEM footprint fits.
        num = max(pl.cdiv(n, tile_rows), min(2, pl.cdiv(n, row_align)))
        tile = _round_up(pl.cdiv(n, num), row_align)
        while tile > row_align and footprint(tile, weight_bufs) > budget:
            tile = _round_up(pl.cdiv(tile, 2), row_align)
        num_tiles = pl.cdiv(n, tile)
        n_pad = num_tiles * tile
        xp = x2 if n_pad == n else jnp.pad(x2, ((0, n_pad - n), (0, 0)))

        flops = 2 * n_pad * (input_dim * d1p + d1p * d2p) + 10 * n_pad * d1p
        bytes_accessed = (n_pad * input_dim * 4 + w1c.size * 2 + w2c.size * 2
                          + (lnp.size + b2p.size) * 4 + n_pad * d2p * out_itemsize)
        cost = pl.CostEstimate(flops=int(flops), transcendentals=int(n_pad),
                               bytes_accessed=int(bytes_accessed))

        def inv(shape):
            idx_map = lambda i: (0,) * len(shape)
            if single_buffer:
                # Grid-invariant operands: no double buffer needed.
                return pl.BlockSpec(shape, idx_map, pipeline_mode=pl.Buffered(1))
            return pl.BlockSpec(shape, idx_map)

        call = pl.pallas_call(
            kernel,
            out_shape=jax.ShapeDtypeStruct((n_pad, d2p), out_dtype),
            grid_spec=pltpu.PrefetchScalarGridSpec(
                num_scalar_prefetch=0,
                grid=(num_tiles,),
                in_specs=[
                    pl.BlockSpec((tile, input_dim), lambda i: (i, 0)),   # x tile (f32)
                    inv((input_dim, d1p)),                               # W1 (bf16, padded)
                    inv((3, d1p)),                                       # [b1; gamma; beta]
                    inv((d1p, d2p)),                                     # W2 (bf16, padded)
                    inv((1, d2p)),                                       # b2 (padded)
                ],
                out_specs=pl.BlockSpec((tile, d2p), lambda i: (i, 0)),
            ),
            compiler_params=pltpu.CompilerParams(
                dimension_semantics=("parallel",),
                vmem_limit_bytes=vmem_limit),
            cost_estimate=cost,
        )
        return call(xp, w1c, lnp, w2c, b2p)

    if _HAS_BUFFERED:
        try:
            out = run(True)
        except pltpu.LoweringException:
            # Buffered(1) rejected at lowering: fall back to default double-buffered
            # weights; footprint() then shrinks the row tile if the extra weight
            # buffer would exceed the VMEM budget.
            out = run(False)
    else:
        out = run(False)

    return out[:n, :d2].reshape(*lead, d2)


def init_params(key, input_dim, hidden_dim):
    """Deterministic synthetic init (PyTorch-style uniform fan-in scaling).
    Linear weights stored pre-transposed as (in_features, out_features)."""
    d1, d2 = 3 * hidden_dim, 2 * hidden_dim
    ks = jax.random.split(key, 4)

    def lin(kw, kb, fan_in, fan_out):
        bound = 1.0 / jnp.sqrt(fan_in)
        w = jax.random.uniform(kw, (fan_in, fan_out), jnp.float32, -bound, bound)
        b = jax.random.uniform(kb, (1, fan_out), jnp.float32, -bound, bound)
        return w, b

    w1, b1 = lin(ks[0], ks[1], input_dim, d1)
    w2, b2 = lin(ks[2], ks[3], d1, d2)
    gamma = jnp.ones((1, d1), jnp.float32)
    beta = jnp.zeros((1, d1), jnp.float32)
    return (w1, b1, gamma, beta, w2, b2)


def fusion_layer_ref(x, params, compute_dtype=jnp.bfloat16):
    """Pure-JAX reference mirroring the kernel's bf16-operand / f32-accumulate matmuls."""
    w1, b1, gamma, beta, w2, b2 = params
    f32 = jnp.float32
    xc = x.astype(compute_dtype).astype(f32)
    w1c = w1.astype(compute_dtype).astype(f32)
    h1 = xc @ w1c + b1
    mean = h1.mean(-1, keepdims=True)
    var = ((h1 - mean) ** 2).mean(-1, keepdims=True)
    h1 = (h1 - mean) / jnp.sqrt(var + LN_EPS) * gamma + beta
    h1 = jnp.maximum(h1, 0.0)                 # Dropout(0.05) is identity in eval mode
    h1c = h1.astype(compute_dtype).astype(f32)
    w2c = w2.astype(compute_dtype).astype(f32)
    return h1c @ w2c + b2


if __name__ == "__main__":
    input_dim = 32
    hidden_dim = 32          # -> 3*hidden = 96 (padded to 128), 2*hidden = 64 (padded to 128)
    batch, seq = 2, 8        # x flattens to (16, 32) -> 2 row tiles of 8 (megacore-friendly)

    key = jax.random.PRNGKey(0)
    kx, kp = jax.random.split(key)
    x = jax.random.normal(kx, (batch, seq, input_dim), jnp.float32)
    params = init_params(kp, input_dim, hidden_dim)

    prepared = prepare_params(params)        # one-time pad / cast / stack
    out = fusion_layer(x, prepared)
    out = jax.block_until_ready(out)

    ref = fusion_layer_ref(x.reshape(-1, input_dim), params).reshape(
        batch, seq, 2 * hidden_dim)
    assert out.shape == (batch, seq, 2 * hidden_dim)
    assert out.dtype == jnp.float32
    assert jnp.allclose(out, ref, atol=1e-3, rtol=1e-3), "mismatch vs reference"

    print("KERNEL_OK")
</pallas_src>

<mosaic_0001>
module attributes {stable_mosaic.version = 11 : i64} {
  func.func @kernel(%arg0: i32, %arg1: memref<8x32xf32, #tpu.memory_space<vmem>>, %arg2: memref<32x128xbf16, #tpu.memory_space<vmem>>, %arg3: memref<3x128xf32, #tpu.memory_space<vmem>>, %arg4: memref<128x128xbf16, #tpu.memory_space<vmem>>, %arg5: memref<1x128xf32, #tpu.memory_space<vmem>>, %arg6: memref<8x128xf32, #tpu.memory_space<vmem>>) attributes {dimension_semantics = [#tpu.dimension_semantics<parallel>], iteration_bounds = array<i64: 2>, scalar_prefetch = 0 : i64, scratch_operands = 0 : i64, tpu.core_type = #tpu.core_type<tc>, window_params = [{transform_indices = @transform_0, window_bounds = array<i64: 8, 32>}, {pipeline_mode = #tpu.pipeline_mode<synchronous>, transform_indices = @transform_1, window_bounds = array<i64: 32, 128>}, {pipeline_mode = #tpu.pipeline_mode<synchronous>, transform_indices = @transform_2, window_bounds = array<i64: 3, 128>}, {pipeline_mode = #tpu.pipeline_mode<synchronous>, transform_indices = @transform_3, window_bounds = array<i64: 128, 128>}, {pipeline_mode = #tpu.pipeline_mode<synchronous>, transform_indices = @transform_4, window_bounds = array<i64: 1, 128>}, {transform_indices = @transform_5, window_bounds = array<i64: 8, 128>}]} {
    %c0 = arith.constant 0 : index
    %c0_0 = arith.constant 0 : index
    %0 = vector.load %arg1[%c0, %c0_0] : memref<8x32xf32, #tpu.memory_space<vmem>>, vector<8x32xf32>
    %1 = arith.truncf %0 : vector<8x32xf32> to vector<8x32xbf16>
    %c0_1 = arith.constant 0 : index
    %c0_2 = arith.constant 0 : index
    %2 = vector.load %arg2[%c0_1, %c0_2] : memref<32x128xbf16, #tpu.memory_space<vmem>>, vector<32x128xbf16>
    %cst = arith.constant dense<0.000000e+00> : vector<8x128xf32>
    %3 = tpu.matmul %1, %2, %cst {dimension_numbers = #tpu.dot_dimension_numbers<[1], [0], [0], [1], [0, 0, 1, 1], [], []>} : vector<8x32xbf16>, vector<32x128xbf16>, vector<8x128xf32> -> vector<8x128xf32>
    %c0_3 = arith.constant 0 : index
    %c0_4 = arith.constant 0 : index
    %4 = vector.load %arg3[%c0_3, %c0_4] : memref<3x128xf32, #tpu.memory_space<vmem>>, vector<3x128xf32>
    %5 = vector.extract_strided_slice %4 {offsets = [0, 0], sizes = [1, 128], strides = [1, 1]} : vector<3x128xf32> to vector<1x128xf32>
    %6 = vector.broadcast %5 : vector<1x128xf32> to vector<8x128xf32>
    %7 = arith.addf %3, %6 : vector<8x128xf32>
    %cst_5 = arith.constant dense<0.000000e+00> : vector<8xf32>
    %8 = vector.multi_reduction <add>, %7, %cst_5 [1] : vector<8x128xf32> to vector<8xf32>
    %9 = vector.shape_cast %8 : vector<8xf32> to vector<8x1xf32>
    %cst_6 = arith.constant 0.010416667 : f32
    %10 = vector.broadcast %cst_6 : f32 to vector<8x1xf32>
    %11 = arith.mulf %9, %10 : vector<8x1xf32>
    %12 = vector.broadcast %11 : vector<8x1xf32> to vector<8x128xf32>
    %13 = arith.subf %7, %12 : vector<8x128xf32>
    %14 = tpu.iota {dimensions = array<i32: 1>} : vector<8x128xi32>
    %c96_i32 = arith.constant 96 : i32
    %15 = vector.broadcast %c96_i32 : i32 to vector<8x128xi32>
    %16 = arith.cmpi slt, %14, %15 : vector<8x128xi32>
    %cst_7 = arith.constant 0.000000e+00 : f32
    %17 = vector.broadcast %cst_7 : f32 to vector<8x128xf32>
    %18 = arith.select %16, %13, %17 : vector<8x128xi1>, vector<8x128xf32>
    %19 = arith.mulf %18, %18 : vector<8x128xf32>
    %cst_8 = arith.constant dense<0.000000e+00> : vector<8xf32>
    %20 = vector.multi_reduction <add>, %19, %cst_8 [1] : vector<8x128xf32> to vector<8xf32>
    %21 = vector.shape_cast %20 : vector<8xf32> to vector<8x1xf32>
    %cst_9 = arith.constant 0.010416667 : f32
    %22 = vector.broadcast %cst_9 : f32 to vector<8x1xf32>
    %23 = arith.mulf %21, %22 : vector<8x1xf32>
    %cst_10 = arith.constant 9.99999974E-6 : f32
    %24 = vector.broadcast %cst_10 : f32 to vector<8x1xf32>
    %25 = arith.addf %23, %24 : vector<8x1xf32>
    %26 = math.rsqrt %25 : vector<8x1xf32>
    %27 = vector.broadcast %26 : vector<8x1xf32> to vector<8x128xf32>
    %28 = arith.mulf %18, %27 : vector<8x128xf32>
    %29 = vector.extract_strided_slice %4 {offsets = [1, 0], sizes = [1, 128], strides = [1, 1]} : vector<3x128xf32> to vector<1x128xf32>
    %30 = vector.broadcast %29 : vector<1x128xf32> to vector<8x128xf32>
    %31 = arith.mulf %28, %30 : vector<8x128xf32>
    %32 = vector.extract_strided_slice %4 {offsets = [2, 0], sizes = [1, 128], strides = [1, 1]} : vector<3x128xf32> to vector<1x128xf32>
    %33 = vector.broadcast %32 : vector<1x128xf32> to vector<8x128xf32>
    %34 = arith.addf %31, %33 : vector<8x128xf32>
    %cst_11 = arith.constant 0.000000e+00 : f32
    %35 = vector.broadcast %cst_11 : f32 to vector<8x128xf32>
    %36 = arith.maximumf %34, %35 : vector<8x128xf32>
    %37 = arith.truncf %36 : vector<8x128xf32> to vector<8x128xbf16>
    %c0_12 = arith.constant 0 : index
    %c0_13 = arith.constant 0 : index
    %38 = vector.load %arg4[%c0_12, %c0_13] : memref<128x128xbf16, #tpu.memory_space<vmem>>, vector<128x128xbf16>
    %cst_14 = arith.constant dense<0.000000e+00> : vector<8x128xf32>
    %39 = tpu.matmul %37, %38, %cst_14 {dimension_numbers = #tpu.dot_dimension_numbers<[1], [0], [0], [1], [0, 0, 1, 1], [], []>} : vector<8x128xbf16>, vector<128x128xbf16>, vector<8x128xf32> -> vector<8x128xf32>
    %c0_15 = arith.constant 0 : index
    %c0_16 = arith.constant 0 : index
    %40 = vector.load %arg5[%c0_15, %c0_16] : memref<1x128xf32, #tpu.memory_space<vmem>>, vector<1x128xf32>
    %41 = vector.broadcast %40 : vector<1x128xf32> to vector<8x128xf32>
    %42 = arith.addf %39, %41 : vector<8x128xf32>
    %c0_17 = arith.constant 0 : index
    %c0_18 = arith.constant 0 : index
    %43 = vector.load %arg6[%c0_17, %c0_18] : memref<8x128xf32, #tpu.memory_space<vmem>>, vector<8x128xf32>
    tpu.vector_store %arg6[%c0_17, %c0_18], %42 {strides = array<i32>} : memref<8x128xf32, #tpu.memory_space<vmem>>, vector<8x128xf32>,
    return
  }
  func.func @transform_0(%arg0: i32) -> (i32, i32) {
    %c0_i32 = arith.constant 0 : i32
    %c0_i32_0 = arith.constant 0 : i32
    return %arg0, %c0_i32 : i32, i32
  }
  func.func @transform_1(%arg0: i32) -> (i32, i32) {
    %c0_i32 = arith.constant 0 : i32
    %c0_i32_0 = arith.constant 0 : i32
    %c0_i32_1 = arith.constant 0 : i32
    return %c0_i32, %c0_i32_0 : i32, i32
  }
  func.func @transform_2(%arg0: i32) -> (i32, i32) {
    %c0_i32 = arith.constant 0 : i32
    %c0_i32_0 = arith.constant 0 : i32
    %c0_i32_1 = arith.constant 0 : i32
    return %c0_i32, %c0_i32_0 : i32, i32
  }
  func.func @transform_3(%arg0: i32) -> (i32, i32) {
    %c0_i32 = arith.constant 0 : i32
    %c0_i32_0 = arith.constant 0 : i32
    %c0_i32_1 = arith.constant 0 : i32
    return %c0_i32, %c0_i32_0 : i32, i32
  }
  func.func @transform_4(%arg0: i32) -> (i32, i32) {
    %c0_i32 = arith.constant 0 : i32
    %c0_i32_0 = arith.constant 0 : i32
    %c0_i32_1 = arith.constant 0 : i32
    return %c0_i32, %c0_i32_0 : i32, i32
  }
  func.func @transform_5(%arg0: i32) -> (i32, i32) {
    %c0_i32 = arith.constant 0 : i32
    %c0_i32_0 = arith.constant 0 : i32
    return %arg0, %c0_i32 : i32, i32
  }
}

</mosaic_0001>

<llo_original>
// kernel: tpu_custom_call.1
$region0: #{tpu_custom_call.1}
  #allocation0 [shape = 'u32[]', space=smem, size = 0x4, offset = 0x4, fixed_abs, tag = 'smem constant byte address 0x4 - core index']
  #allocation1 [shape = 'u32[72,128]{1,0:T(1,128)}', space=vmem, size = 0x9000, scoped, tag = 'internal scratch']
  %s0 = inlined_call_operand.hbm [shape: f32[16,32], index: 0, kind: input, shape index: {}]
  %s1 = inlined_call_operand.hbm [shape: bf16[32,128], index: 1, kind: input, shape index: {}]
  %s2 = inlined_call_operand.hbm [shape: f32[3,128], index: 2, kind: input, shape index: {}]
  %s3 = inlined_call_operand.hbm [shape: bf16[128,128], index: 3, kind: input, shape index: {}]
  %s4 = inlined_call_operand.vmem [shape: f32[1,128], index: 4, kind: input, shape index: {}]
  %s5 = inlined_call_operand.hbm [shape: f32[16,128], index: 5, kind: output, shape index: {}]
  %s6 = sld [smem:[#allocation0]]
  $region69: #{tpu_custom_call.1} parent=0
    _
  %s8 = ssub.s32 1, %s6
  %s9 = scalar_select 0, %s8, %s6
  $region1: #{tpu_custom_call.1} parent=0
    #allocation2 [shape = 'u8[8192]{0}', space=vmem, size = 0x2000, scoped, tag = 'input window, operand 0']
    #allocation3 [shape = 's32[2]{0}', space=sflag, size = 0x8, scoped, tag = 'scoped memory for tpu_custom_call.1']
    #allocation4 [shape = 's32[2]{0}', space=sflag, size = 0x8, scoped, tag = 'scoped memory for tpu_custom_call.1']
    #allocation5 [shape = 'u8[8192]{0}', space=vmem, size = 0x2000, scoped, tag = 'input window, operand 1, single buffered']
    #allocation6 [shape = 's32[1]{0}', space=sflag, size = 0x4, scoped, tag = 'scoped memory for tpu_custom_call.1']
    #allocation7 [shape = 'u8[2048]{0}', space=vmem, size = 0x800, scoped, tag = 'input window, operand 2, single buffered']
    #allocation8 [shape = 'u8[32768]{0}', space=vmem, size = 0x8000, scoped, tag = 'input window, operand 3, single buffered']
    #allocation9 [shape = 's32[1]{0}', space=sflag, size = 0x4, scoped, tag = 'scoped memory for tpu_custom_call.1']
    #allocation10 [shape = 'u8[8192]{0}', space=vmem, size = 0x2000, scoped, tag = 'output window, operand 0']
    %10 = vsyncpa [#allocation3], 0
    %s11 = scalar_lea.sflag [#allocation3], 1
    %12 = vsyncpa %s11, 0
    %13 = vsyncpa [#allocation6], 0
    %14 = vsyncpa [#allocation9], 0
    %15 = vsyncpa [#allocation4], 0
    %s16 = scalar_lea.sflag [#allocation4], 1
    %17 = vsyncpa %s16, 0
    loop: start=0, step=1, limit=4
    $region2: #{tpu_custom_call.1} parent=1 // loop_pre_header
      _
    $region3: #{tpu_custom_call.1} parent=1 // loop_header
      %s19 = sphi 0, %s23
      %p20 = scmp.ge.s32.totalorder %s19, 4
      %s29 = sphi 0, %s31
      %s32 = sphi 0, %s29
      %s33 = sphi 0, %s32
      %s49 = sphi 0, %s33
      %s53 = sphi 0, %s53
      %s55 = sphi 0, %s53
      %s56 = sphi 0, %s55
      %s70 = sphi 0, %s56
      %s74 = sphi 0, %s74
      %s76 = sphi 0, %s74
      %s77 = sphi 0, %s76
      %s91 = sphi 0, %s77
      %s95 = sphi 0, %s95
      %s97 = sphi 0, %s95
      %s98 = sphi 0, %s97
      %s112 = sphi 0, %s98
      %s116 = sphi 0, %s116
      %s118 = sphi 0, %s116
      %s119 = sphi 0, %s118
      %s133 = sphi 0, %s119
      %s139 = sphi 0, %s141
      %s142 = sphi 0, %s139
      %s143 = sphi 0, %s142
      %s159 = sphi 0, %s143
    $region4: #{tpu_custom_call.1} parent=1 // loop_header_branch
      %22 = sbr.rel (%p20) target = $region8
    $region5: #{tpu_custom_call.1} parent=1 // loop_body
      %s24 = ssub.s32 %s19, 1
      %s25 = ssub.s32 %s19, 2
      %s26 = sadd.s32 %s19, 1
      %s27 = ssub.s32 %s19, %s26
      %p28 = scmp.eq.s32.totalorder %s27, 0
      %s30 = sadd.s32 %s29, 1
      %s31 = scalar_select %p28, %s29, %s30
      %p34 = pneg %p28
      %p35 = scmp.eq.s32.totalorder %s19, 1
      %p36 = por %p34, %p35
      %p37 = scmp.ne.s32.totalorder %s29, %s32
      %p38 = scmp.eq.s32.totalorder %s19, 0
      %p39 = por %p37, %p38
      %p40 = scmp.ne.s32.totalorder %s29, %s32
      %p41 = scmp.eq.s32.totalorder %s24, 1
      %p42 = por %p40, %p41
      %p43 = scmp.ne.s32.totalorder %s32, %s33
      %p44 = scmp.eq.s32.totalorder %s24, 0
      %p45 = por %p43, %p44
      %p46 = scmp.ne.s32.totalorder %s32, %s33
      %p47 = scmp.eq.s32.totalorder %s25, 1
      %p48 = por %p46, %p47
      %p50 = scmp.ne.s32.totalorder %s33, %s49
      %p51 = scmp.eq.s32.totalorder %s25, 0
      %p52 = por %p50, %p51
      %s54 = sadd.s32 %s53, 1
      %p57 = scmp.eq.s32.totalorder %s19, 1
      %p58 = scmp.ne.s32.totalorder %s53, %s55
      %p59 = scmp.eq.s32.totalorder %s19, 0
      %p60 = por %p58, %p59
      %p61 = scmp.ne.s32.totalorder %s53, %s55
      %p62 = scmp.eq.s32.totalorder %s24, 1
      %p63 = por %p61, %p62
      %p64 = scmp.ne.s32.totalorder %s55, %s56
      %p65 = scmp.eq.s32.totalorder %s24, 0
      %p66 = por %p64, %p65
      %p67 = scmp.ne.s32.totalorder %s55, %s56
      %p68 = scmp.eq.s32.totalorder %s25, 1
      %p69 = por %p67, %p68
      %p71 = scmp.ne.s32.totalorder %s56, %s70
      %p72 = scmp.eq.s32.totalorder %s25, 0
      %p73 = por %p71, %p72
      %s75 = sadd.s32 %s74, 1
      %p78 = scmp.eq.s32.totalorder %s19, 1
      %p79 = scmp.ne.s32.totalorder %s74, %s76
      %p80 = scmp.eq.s32.totalorder %s19, 0
      %p81 = por %p79, %p80
      %p82 = scmp.ne.s32.totalorder %s74, %s76
      %p83 = scmp.eq.s32.totalorder %s24, 1
      %p84 = por %p82, %p83
      %p85 = scmp.ne.s32.totalorder %s76, %s77
      %p86 = scmp.eq.s32.totalorder %s24, 0
      %p87 = por %p85, %p86
      %p88 = scmp.ne.s32.totalorder %s76, %s77
      %p89 = scmp.eq.s32.totalorder %s25, 1
      %p90 = por %p88, %p89
      %p92 = scmp.ne.s32.totalorder %s77, %s91
      %p93 = scmp.eq.s32.totalorder %s25, 0
      %p94 = por %p92, %p93
      %s96 = sadd.s32 %s95, 1
      %p99 = scmp.eq.s32.totalorder %s19, 1
      %p100 = scmp.ne.s32.totalorder %s95, %s97
      %p101 = scmp.eq.s32.totalorder %s19, 0
      %p102 = por %p100, %p101
      %p103 = scmp.ne.s32.totalorder %s95, %s97
      %p104 = scmp.eq.s32.totalorder %s24, 1
      %p105 = por %p103, %p104
      %p106 = scmp.ne.s32.totalorder %s97, %s98
      %p107 = scmp.eq.s32.totalorder %s24, 0
      %p108 = por %p106, %p107
      %p109 = scmp.ne.s32.totalorder %s97, %s98
      %p110 = scmp.eq.s32.totalorder %s25, 1
      %p111 = por %p109, %p110
      %p113 = scmp.ne.s32.totalorder %s98, %s112
      %p114 = scmp.eq.s32.totalorder %s25, 0
      %p115 = por %p113, %p114
      %s117 = sadd.s32 %s116, 1
      %p120 = scmp.eq.s32.totalorder %s19, 1
      %p121 = scmp.ne.s32.totalorder %s116, %s118
      %p122 = scmp.eq.s32.totalorder %s19, 0
      %p123 = por %p121, %p122
      %p124 = scmp.ne.s32.totalorder %s116, %s118
      %p125 = scmp.eq.s32.totalorder %s24, 1
      %p126 = por %p124, %p125
      %p127 = scmp.ne.s32.totalorder %s118, %s119
      %p128 = scmp.eq.s32.totalorder %s24, 0
      %p129 = por %p127, %p128
      %p130 = scmp.ne.s32.totalorder %s118, %s119
      %p131 = scmp.eq.s32.totalorder %s25, 1
      %p132 = por %p130, %p131
      %p134 = scmp.ne.s32.totalorder %s119, %s133
      %p135 = scmp.eq.s32.totalorder %s25, 0
      %p136 = por %p134, %p135
      %s137 = ssub.s32 %s19, %s26
      %p138 = scmp.eq.s32.totalorder %s137, 0
      %s140 = sadd.s32 %s139, 1
      %s141 = scalar_select %p138, %s139, %s140
      %p144 = pneg %p138
      %p145 = scmp.eq.s32.totalorder %s19, 1
      %p146 = por %p144, %p145
      %p147 = scmp.ne.s32.totalorder %s139, %s142
      %p148 = scmp.eq.s32.totalorder %s19, 0
      %p149 = por %p147, %p148
      %p150 = scmp.ne.s32.totalorder %s139, %s142
      %p151 = scmp.eq.s32.totalorder %s24, 1
      %p152 = por %p150, %p151
      %p153 = scmp.ne.s32.totalorder %s142, %s143
      %p154 = scmp.eq.s32.totalorder %s24, 0
      %p155 = por %p153, %p154
      %p156 = scmp.ne.s32.totalorder %s142, %s143
      %p157 = scmp.eq.s32.totalorder %s25, 1
      %p158 = por %p156, %p157
      %p160 = scmp.ne.s32.totalorder %s143, %s159
      %p161 = scmp.eq.s32.totalorder %s25, 0
      %p162 = por %p160, %p161
      %p163 = scmp.le.s32.totalorder 1, %s19
      %p164 = scmp.lt.s32.totalorder %s19, 3
      %p165 = pnand %p163, %p164
      %p166 = pneg %p165
      // Predicated region
      $region9: #{tpu_custom_call.1} parent=5 // pred_check
        _
      $region10: #{tpu_custom_call.1} parent=5 // pred_check_branch
        %168 = sbr.rel (%p165) target = $region12
      $region11: #{tpu_custom_call.1} parent=5 // pred_region
        %s169 = ssub.s32 %s19, 1
        // Predicated region
        $region13: #{tpu_custom_call.1} parent=11 // pred_check
          %p170 = pneg %p66
        $region14: #{tpu_custom_call.1} parent=11 // pred_check_branch
          %172 = sbr.rel (%p170) target = $region16
        $region15: #{tpu_custom_call.1} parent=11 // pred_region
          %174 = vsyncadd [#allocation6], 0
          %s175 = sshll.u32 %s1, 4
          %s176 = int_to_ptr.hbm [resolvable:$true] %s175
          %s177 = sshll.u32 [#allocation5], 4
          %s178 = int_to_ptr.vmem [resolvable:$true] %s177
          %183 = dma.hbm_to_vmem [thread:$0]  %s176, 256, %s178, [#allocation6], 64, 64, 4
        $region16: #{tpu_custom_call.1} parent=11 // pred_fallthru
          _
        // Predicated region
        $region17: #{tpu_custom_call.1} parent=11 // pred_check
          %p184 = pneg %p87
        $region18: #{tpu_custom_call.1} parent=11 // pred_check_branch
          %186 = sbr.rel (%p184) target = $region20
        $region19: #{tpu_custom_call.1} parent=11 // pred_region
          %188 = vsyncadd [#allocation6], 0
          %s190 = sshll.u32 %s2, 4
          %s191 = int_to_ptr.hbm [resolvable:$true] %s190
          %s192 = sshll.u32 [#allocation7], 4
          %s193 = int_to_ptr.vmem [resolvable:$true] %s192
          %195 = dma.hbm_to_vmem [thread:$0]  %s191, 64, %s193, [#allocation6]
        $region20: #{tpu_custom_call.1} parent=11 // pred_fallthru
          _
        // Predicated region
        $region21: #{tpu_custom_call.1} parent=11 // pred_check
          %p196 = pneg %p108
        $region22: #{tpu_custom_call.1} parent=11 // pred_check_branch
          %198 = sbr.rel (%p196) target = $region24
        $region23: #{tpu_custom_call.1} parent=11 // pred_region
          %200 = vsyncadd [#allocation9], 0
          %s201 = sshll.u32 %s3, 4
          %s202 = int_to_ptr.hbm [resolvable:$true] %s201
          %s203 = sshll.u32 [#allocation8], 4
          %s204 = int_to_ptr.vmem [resolvable:$true] %s203
          %209 = dma.hbm_to_vmem [thread:$0]  %s202, 1024, %s204, [#allocation9], 64, 64, 4
        $region24: #{tpu_custom_call.1} parent=11 // pred_fallthru
          _
        // Predicated region
        $region25: #{tpu_custom_call.1} parent=11 // pred_check
          %p210 = pneg %p129
        $region26: #{tpu_custom_call.1} parent=11 // pred_check_branch
          %212 = sbr.rel (%p210) target = $region28
        $region27: #{tpu_custom_call.1} parent=11 // pred_region
          _
        $region28: #{tpu_custom_call.1} parent=11 // pred_fallthru
          _
      $region12: #{tpu_custom_call.1} parent=5 // pred_fallthru
        _
      %p213 = scmp.lt.s32.totalorder %s19, 2
      // Predicated region
      $region29: #{tpu_custom_call.1} parent=5 // pred_check
        %p214 = pneg %p213
      $region30: #{tpu_custom_call.1} parent=5 // pred_check_branch
        %216 = sbr.rel (%p214) target = $region32
      $region31: #{tpu_custom_call.1} parent=5 // pred_region
        // Predicated region
        $region33: #{tpu_custom_call.1} parent=31 // pred_check
          %p217 = pneg %p39
        $region34: #{tpu_custom_call.1} parent=31 // pred_check_branch
          %219 = sbr.rel (%p217) target = $region36
        $region35: #{tpu_custom_call.1} parent=31 // pred_region
          %s220 = sand.u32 %s29, 1
          %s221 = scalar_lea.sflag [#allocation3], %s220
          %s222 = sand.u32 %s29, 1
          %s223 = smul.addr %s222, 8
          %s224 = scalar_lea.vmem [#allocation2], %s223
          %226 = vsyncadd %s221, 0
          %s227 = smul.addr %s19, 8
          %s228 = scalar_lea.hbm %s0, %s227
          %s230 = sshll.u32 %s228, 4
          %s231 = int_to_ptr.hbm [resolvable:$true] %s230
          %s232 = sshll.u32 %s224, 4
          %s233 = int_to_ptr.vmem [resolvable:$true] %s232
          %235 = dma.hbm_to_vmem [thread:$0]  %s231, 128, %s233, %s221
        $region36: #{tpu_custom_call.1} parent=31 // pred_fallthru
          _
      $region32: #{tpu_custom_call.1} parent=5 // pred_fallthru
        _
      %p236 = scmp.le.s32.totalorder 1, %s19
      %p237 = scmp.lt.s32.totalorder %s19, 3
      %p238 = pnand %p236, %p237
      %p239 = pneg %p238
      // Predicated region
      $region37: #{tpu_custom_call.1} parent=5 // pred_check
        _
      $region38: #{tpu_custom_call.1} parent=5 // pred_check_branch
        %241 = sbr.rel (%p238) target = $region40
      $region39: #{tpu_custom_call.1} parent=5 // pred_region
        %s242 = ssub.s32 %s19, 1
        %s243 = sand.u32 %s32, 1
        %s244 = scalar_lea.sflag [#allocation3], %s243
        %s245 = sand.u32 %s32, 1
        %s246 = smul.addr %s245, 8
        %s247 = scalar_lea.vmem [#allocation2], %s246
        // Predicated region
        $region41: #{tpu_custom_call.1} parent=39 // pred_check
          %p248 = pneg %p45
        $region42: #{tpu_custom_call.1} parent=39 // pred_check_branch
          %250 = sbr.rel (%p248) target = $region44
        $region43: #{tpu_custom_call.1} parent=39 // pred_region
          %252 = dma.done %s244, 128
        $region44: #{tpu_custom_call.1} parent=39 // pred_fallthru
          _
        // Predicated region
        $region45: #{tpu_custom_call.1} parent=39 // pred_check
          %p253 = pneg %p66
        $region46: #{tpu_custom_call.1} parent=39 // pred_check_branch
          %255 = sbr.rel (%p253) target = $region48
        $region47: #{tpu_custom_call.1} parent=39 // pred_region
          %257 = dma.done [#allocation6], 256
        $region48: #{tpu_custom_call.1} parent=39 // pred_fallthru
          _
        // Predicated region
        $region49: #{tpu_custom_call.1} parent=39 // pred_check
          %p258 = pneg %p87
        $region50: #{tpu_custom_call.1} parent=39 // pred_check_branch
          %260 = sbr.rel (%p258) target = $region52
        $region51: #{tpu_custom_call.1} parent=39 // pred_region
          %262 = dma.done [#allocation6], 64
        $region52: #{tpu_custom_call.1} parent=39 // pred_fallthru
          _
        // Predicated region
        $region53: #{tpu_custom_call.1} parent=39 // pred_check
          %p263 = pneg %p108
        $region54: #{tpu_custom_call.1} parent=39 // pred_check_branch
          %265 = sbr.rel (%p263) target = $region56
        $region55: #{tpu_custom_call.1} parent=39 // pred_region
          %267 = dma.done [#allocation9], 1024
        $region56: #{tpu_custom_call.1} parent=39 // pred_fallthru
          _
        %s268 = sand.u32 %s32, 1
        %s269 = scalar_lea.sflag [#allocation3], %s268
        %s270 = sand.u32 %s32, 1
        %s271 = smul.addr %s270, 8
        %s272 = scalar_lea.vmem [#allocation2], %s271
        %p273 = pneg %p45
        %p274 = pneg %p42
        %p275 = pneg %p66
        %p276 = pneg %p63
        %p277 = pneg %p87
        %p278 = pneg %p84
        %p279 = pneg %p108
        %p280 = pneg %p105
        %p281 = pneg %p129
        %p282 = pneg %p126
        %p283 = pneg %p155
        %p284 = pneg %p152
        %s285 = sand.u32 %s142, 1
        %s286 = scalar_lea.sflag [#allocation4], %s285
        %s287 = sand.u32 %s142, 1
        %s288 = smul.addr %s287, 8
        %s289 = scalar_lea.vmem [#allocation10], %s288
        %v291 = vld [vmem:[%s247] sm:$0xff]
        %v292 = vpack.c.bf16 %v291, %v291
        %v293 = vld [vmem:[#allocation5] sm:$0xf]
        %v294 = vld [vmem:[#allocation5 + $0x4] sm:$0xf]
        %v295 = vld [vmem:[#allocation5 + $0x8] sm:$0xf]
        %v296 = vld [vmem:[#allocation5 + $0xc] sm:$0xf]
        %v297 = vld [vmem:[#allocation7] sm:$0x7]
        %v298 = vperm.slane %v297, 0
        %v303 = vunpack.c.l.b16 %v293
        %v304 = vunpack.c.l.b16 %v294
        %v305 = vunpack.c.l.b16 %v295
        %v306 = vunpack.c.l.b16 %v296
        %v307 = vpack.c.b16 %v304, %v303
        %v308 = vpack.c.b16 %v306, %v305
        %vm311 = vcmask 261120
        %v313 = vsel %vm311, %v292, 0
        %315 = vmatpush.bf16.msra.mxu0 0
        %316 = vmatpush.bf16.msra.mxu0 0
        %317 = vmatpush.bf16.msra.mxu0 0
        %318 = vmatpush.bf16.msra.mxu0 0
        %319 = vmatpush.bf16.msra.mxu0 0
        %320 = vmatpush.bf16.msra.mxu0 0
        %321 = vmatpush.bf16.msra.mxu0 %v308
        %322 = vmatpush.bf16.msra.mxu0 %v307
        %323 = vmatmul.bf16.gmra.mxu0 %v313
        %v324 = vpop.f32.mrf.mxu0
        %v325 = vadd.f32 %v298, %v324
        %v326 = vpop.f32.mrf.mxu0
        %327 = vdwg.mxu0
        %328 = vadd.xlane.f32.xlu0 %v325
        %v329 = vpop.xlane.xlu0 %328
        %v330 = vmul.f32 %v329, 0.010416667
        %v331 = vsub.f32 %v325, %v330
        %v332 = vlaneseq
        %v333 = vand.u32 %v332, 127
        %vm334 = vcmp.lt.s32.totalorder %v333, 96
        %v335 = vsel %vm334, %v331, 0.0
        %v336 = vmul.f32 %v335, %v335
        %337 = vadd.xlane.f32.xlu0 %v336
        %v338 = vpop.xlane.xlu0 %337
        %v339 = vmul.f32 %v338, 0.010416667
        %v340 = vadd.f32 %v339, 1e-05
        %v341 = vrsqrt.pop %v340
        %v342 = vmul.f32 %v341, %v340
        %v343 = vmul.f32 %v342, %v341
        %v344 = vmul.f32 0.5, %v343
        %v345 = vsub.f32 1.5, %v344
        %v346 = vmul.f32 %v341, %v345
        %vm347 = vweird.f32 %v340
        %vm348 = vweird.f32 %v341
        %vm349 = vmor %vm347, %vm348
        %v350 = vsel %vm349, %v341, %v346
        %v351 = vmul.f32 %v335, %v350
        %v352 = vperm.slane %v297, 1
        %v353 = vmul.f32 %v351, %v352
        %v354 = vperm.slane %v297, 2
        %v355 = vadd.f32 %v353, %v354
        %v356 = vmax.f32 %v355, 0.0
        %v357 = vpack.c.bf16 %v356, %v356
        %v358 = vld [vmem:[#allocation8] sm:$0xf]
        %v359 = vld [vmem:[#allocation8 + $0x4] sm:$0xf]
        %v360 = vld [vmem:[#allocation8 + $0x8] sm:$0xf]
        %v361 = vld [vmem:[#allocation8 + $0xc] sm:$0xf]
        %v362 = vld [vmem:[#allocation8 + $0x10] sm:$0xf]
        %v363 = vld [vmem:[#allocation8 + $0x14] sm:$0xf]
        %v364 = vld [vmem:[#allocation8 + $0x18] sm:$0xf]
        %v365 = vld [vmem:[#allocation8 + $0x1c] sm:$0xf]
        %v366 = vld [vmem:[#allocation8 + $0x20] sm:$0xf]
        %v367 = vld [vmem:[#allocation8 + $0x24] sm:$0xf]
        %v368 = vld [vmem:[#allocation8 + $0x28] sm:$0xf]
        %v369 = vld [vmem:[#allocation8 + $0x2c] sm:$0xf]
        %v370 = vld [vmem:[#allocation8 + $0x30] sm:$0xf]
        %v371 = vld [vmem:[#allocation8 + $0x34] sm:$0xf]
        %v372 = vld [vmem:[#allocation8 + $0x38] sm:$0xf]
        %v373 = vld [vmem:[#allocation8 + $0x3c] sm:$0xf]
        %v374 = vld [vmem:[%s4] sm:$0x1]
        %v376 = vperm.slane %v374, 0
        %v394 = vunpack.c.l.b16 %v358
        %v395 = vunpack.c.l.b16 %v359
        %v396 = vunpack.c.l.b16 %v360
        %v397 = vunpack.c.l.b16 %v361
        %v398 = vunpack.c.l.b16 %v362
        %v399 = vunpack.c.l.b16 %v363
        %v400 = vunpack.c.l.b16 %v364
        %v401 = vunpack.c.l.b16 %v365
        %v402 = vunpack.c.l.b16 %v366
        %v403 = vunpack.c.l.b16 %v367
        %v404 = vunpack.c.l.b16 %v368
        %v405 = vunpack.c.l.b16 %v369
        %v406 = vunpack.c.l.b16 %v370
        %v407 = vunpack.c.l.b16 %v371
        %v408 = vunpack.c.l.b16 %v372
        %v409 = vunpack.c.l.b16 %v373
        %v410 = vpack.c.b16 %v395, %v394
        %v411 = vpack.c.b16 %v397, %v396
        %v412 = vpack.c.b16 %v399, %v398
        %v413 = vpack.c.b16 %v401, %v400
        %v414 = vpack.c.b16 %v403, %v402
        %v415 = vpack.c.b16 %v405, %v404
        %v416 = vpack.c.b16 %v407, %v406
        %v417 = vpack.c.b16 %v409, %v408
        %426 = vmatpush.bf16.msra.mxu0 %v417
        %427 = vmatpush.bf16.msra.mxu0 %v416
        %428 = vmatpush.bf16.msra.mxu0 %v415
        %429 = vmatpush.bf16.msra.mxu0 %v414
        %430 = vmatpush.bf16.msra.mxu0 %v413
        %431 = vmatpush.bf16.msra.mxu0 %v412
        %432 = vmatpush.bf16.msra.mxu0 %v411
        %433 = vmatpush.bf16.msra.mxu0 %v410
        %434 = vmatmul.bf16.gmra.mxu0 %v357
        %v435 = vpop.f32.mrf.mxu0
        %v436 = vadd.f32 %v376, %v435
        %v437 = vpop.f32.mrf.mxu0
        %438 = vdwg.mxu0
        %439 = vst [vmem:[%s289] sm:$0xff] %v436
        %s440 = sand.u32 %s142, 1
        %s441 = scalar_lea.sflag [#allocation4], %s440
        %s442 = sand.u32 %s142, 1
        %s443 = smul.addr %s442, 8
        %s444 = scalar_lea.vmem [#allocation10], %s443
        // Predicated region
        $region57: #{tpu_custom_call.1} parent=39 // pred_check
          %p445 = pneg %p152
        $region58: #{tpu_custom_call.1} parent=39 // pred_check_branch
          %447 = sbr.rel (%p445) target = $region60
        $region59: #{tpu_custom_call.1} parent=39 // pred_region
          %449 = vsyncadd %s441, 0
          %s450 = smul.addr %s24, 8
          %s451 = scalar_lea.hbm %s5, %s450
          %s453 = sshll.u32 %s444, 4
          %s454 = int_to_ptr.vmem [resolvable:$true] %s453
          %s455 = sshll.u32 %s451, 4
          %s456 = int_to_ptr.hbm [resolvable:$true] %s455
          %458 = dma.vmem_to_hbm [thread:$0]  %s454, 128, %s456, %s441
        $region60: #{tpu_custom_call.1} parent=39 // pred_fallthru
          _
      $region40: #{tpu_custom_call.1} parent=5 // pred_fallthru
        _
      %p459 = scmp.le.s32.totalorder 2, %s19
      // Predicated region
      $region61: #{tpu_custom_call.1} parent=5 // pred_check
        %p460 = pneg %p459
      $region62: #{tpu_custom_call.1} parent=5 // pred_check_branch
        %462 = sbr.rel (%p460) target = $region64
      $region63: #{tpu_custom_call.1} parent=5 // pred_region
        %s463 = ssub.s32 %s19, 2
        // Predicated region
        $region65: #{tpu_custom_call.1} parent=63 // pred_check
          %p464 = pneg %p158
        $region66: #{tpu_custom_call.1} parent=63 // pred_check_branch
          %466 = sbr.rel (%p464) target = $region68
        $region67: #{tpu_custom_call.1} parent=63 // pred_region
          %s467 = sand.u32 %s143, 1
          %s468 = scalar_lea.sflag [#allocation4], %s467
          %s469 = sand.u32 %s143, 1
          %s470 = smul.addr %s469, 8
          %s471 = scalar_lea.vmem [#allocation10], %s470
          %473 = dma.done %s468, 128
        $region68: #{tpu_custom_call.1} parent=63 // pred_fallthru
          _
      $region64: #{tpu_custom_call.1} parent=5 // pred_fallthru
        _
    $region6: #{tpu_custom_call.1} parent=1 // loop_footer
      %s23 = sadd.s32 1, %s19
    $region7: #{tpu_custom_call.1} parent=1 // loop_footer_branch
      %18 = sbr.rel target = $region3
    $region8: #{tpu_custom_call.1} parent=1 // loop_exit
      _
    %474 = vsyncpa [#allocation3], 1
    %s475 = scalar_lea.sflag [#allocation3], 1
    %476 = vsyncpa %s475, 1
    %477 = vsyncpa [#allocation6], 1
    %478 = vsyncpa [#allocation9], 1
    %479 = vsyncpa [#allocation4], 1
    %s480 = scalar_lea.sflag [#allocation4], 1
    %481 = vsyncpa %s480, 1

</llo_original>
